<compile_context>
chip_gen: v7x
topology: tpu7x:2x2x1
jax: 0.10.0
libtpu: 0.0.40
codegen_flags: <defaults>
</compile_context>

<pallas_src>
import math
from functools import partial

import jax
import jax.numpy as jnp
from jax.experimental import pallas as pl
from jax.experimental.pallas import tpu as pltpu


def _round_up(x, m):
    return ((x + m - 1) // m) * m


def _leaky(v):
    # nn.LeakyReLU(negative_slope=0.2)
    return jnp.where(v >= 0, v, 0.2 * v)


def net_actor_kernel(x_ref, w_up_ref, w_dn_ref, w_h_ref, b_ref, o_ref, *, D, N, O, split_k):
    f32 = jnp.float32
    mm = w_up_ref.dtype                      # MXU operand dtype (f32 or bf16)
    o_pad = o_ref.shape[1]                   # lane-dense padded head width (multiple of 128)

    x0 = x_ref[...]                          # (TB, D) f32

    # Biases stay f32 (padded lanes are zero-filled host-side).
    b1a = b_ref[0:1, 0:N]
    b1b = b_ref[1:2, 0:D]
    b2a = b_ref[2:3, 0:N]
    b_h = b_ref[4:5, 0:o_pad]

    # ---- rb1: x1 = leaky(x0 + fc2(leaky(fc1(x0)))) ----
    h1 = _leaky(jnp.dot(x0.astype(mm), w_up_ref[0:D, :], preferred_element_type=f32) + b1a)
    x1 = _leaky(x0 + jnp.dot(h1.astype(mm), w_dn_ref[:, 0:D], preferred_element_type=f32) + b1b)

    if split_k:
        # ---- rb2 + heads, concat-free K-split path (D >= 128) ----
        h2 = _leaky(jnp.dot(x0.astype(mm), w_up_ref[D:2 * D, :], preferred_element_type=f32)
                    + jnp.dot(x1.astype(mm), w_up_ref[2 * D:3 * D, :], preferred_element_type=f32)
                    + b2a)
        h2m = h2.astype(mm)
        x2a = _leaky(x0 + jnp.dot(h2m, w_dn_ref[:, D:2 * D], preferred_element_type=f32)
                     + b_ref[3:4, 0:D])
        x2b = _leaky(x1 + jnp.dot(h2m, w_dn_ref[:, 2 * D:3 * D], preferred_element_type=f32)
                     + b_ref[3:4, D:2 * D])
        z = (jnp.dot(x2a.astype(mm), w_h_ref[0:D, :], preferred_element_type=f32)
             + jnp.dot(x2b.astype(mm), w_h_ref[D:2 * D, :], preferred_element_type=f32)
             + b_h)
    else:
        # ---- rb2 on cat([x0, x1], -1): single cheap lane concat for small D ----
        xc = jnp.concatenate([x0, x1], axis=-1)              # (TB, 2D) f32
        b2b = b_ref[3:4, 0:2 * D]
        h2 = _leaky(jnp.dot(xc.astype(mm), w_up_ref[D:3 * D, :], preferred_element_type=f32) + b2a)
        x2 = _leaky(xc + jnp.dot(h2.astype(mm), w_dn_ref[:, D:3 * D], preferred_element_type=f32) + b2b)
        z = jnp.dot(x2.astype(mm), w_h_ref[...], preferred_element_type=f32) + b_h

    # ---- fused heads, ONE transcendental per element: tanh(x) = 2*sigmoid(2x) - 1 ----
    lane = jax.lax.broadcasted_iota(jnp.int32, z.shape, dimension=1)
    is_sig = lane < O
    t = jax.nn.sigmoid(jnp.where(is_sig, z, 2.0 * z))
    o_ref[...] = jnp.where(is_sig, t, 2.0 * t - 1.0).astype(o_ref.dtype)


def _resident_spec(a):
    """Whole-array, grid-invariant (VMEM-resident) spec; single-buffered when supported."""
    idx_map = lambda i: (0,) * a.ndim
    try:
        return pl.BlockSpec(a.shape, idx_map, pipeline_mode=pl.Buffered(1))
    except (TypeError, AttributeError):
        return pl.BlockSpec(a.shape, idx_map)   # fallback: default double buffering


@partial(jax.jit, static_argnames=("out_width", "out_dtype"))
def net_actor_forward(obs, w_up, w_dn, w_h, b_slab, *, out_width, out_dtype=jnp.float32):
    """obs: (B, D) f32 -> (B, out_width) where out_width = 2*(out_dim-1)."""
    B, D = obs.shape
    assert w_up.shape[0] == 3 * D
    N_pad = w_up.shape[1]
    O_pad = w_h.shape[1]
    split_k = D >= 128                      # concat-free path once D spans full lane tiles

    # --- batch tiling: large tiles (kernel is mem/overhead bound), >=2 tiles for v7x ---
    n_tiles = pl.cdiv(B, 1024)
    if B >= 16:
        n_tiles = max(n_tiles, 2)           # keep both v7x TensorCores busy
    TB = _round_up(pl.cdiv(B, n_tiles), 16)
    TB = min(TB, _round_up(B, 8))
    grid = (pl.cdiv(B, TB),)

    # --- explicit VMEM budget: >= default 32 MiB, <= v7x physical 64 MiB ---
    w_isz = jnp.dtype(w_up.dtype).itemsize
    o_isz = jnp.dtype(out_dtype).itemsize
    slab_bytes = (w_up.size + w_dn.size + w_h.size) * w_isz + b_slab.size * 4
    stream_bytes = 2 * TB * D * 4 + 2 * TB * O_pad * o_isz
    scratch_bytes = 8 * TB * max(N_pad, 2 * D) * 4
    vmem_limit = int(max(32 << 20,
                         min(2 * slab_bytes + stream_bytes + scratch_bytes + (2 << 20), 64 << 20)))

    x_spec = pl.BlockSpec((TB, D), lambda i: (i, 0))
    out_spec = pl.BlockSpec((TB, O_pad), lambda i: (i, 0))

    out_padded = pl.pallas_call(
        partial(net_actor_kernel, D=D, N=N_pad, O=out_width // 2, split_k=split_k),
        out_shape=jax.ShapeDtypeStruct((B, O_pad), out_dtype),
        grid=grid,
        in_specs=[x_spec, _resident_spec(w_up), _resident_spec(w_dn),
                  _resident_spec(w_h), _resident_spec(b_slab)],
        out_specs=out_spec,
        compiler_params=pltpu.CompilerParams(
            dimension_semantics=("parallel",),
            vmem_limit_bytes=vmem_limit),
    )(obs, w_up, w_dn, w_h, b_slab)

    # Padded head lanes hold dummy values of 0 — slice them off.
    return out_padded[:, :out_width]


def init_params(key, in_dim, out_dim, n_neurons):
    """Synthetic params mirroring the PyTorch module (weights stored transposed, (in,out))."""
    D, N, O = in_dim, n_neurons, out_dim - 1
    ks = jax.random.split(key, 12)
    u = lambda k, shape, b: jax.random.uniform(k, shape, jnp.float32, -b, b)
    return dict(
        # rb1
        w1a=u(ks[0], (D, N), 1 / math.sqrt(D)),          b1a=u(ks[1], (N,), 1 / math.sqrt(D)),
        w1b=u(ks[2], (N, D), 1 / math.sqrt(N)),          b1b=u(ks[3], (D,), 1 / math.sqrt(N)),
        # rb2
        w2a=u(ks[4], (2 * D, N), 1 / math.sqrt(2 * D)),  b2a=u(ks[5], (N,), 1 / math.sqrt(2 * D)),
        w2b=u(ks[6], (N, 2 * D), 1 / math.sqrt(N)),      b2b=u(ks[7], (2 * D,), 1 / math.sqrt(N)),
        # heads: out1.weight re-init'd to U(+-1/sqrt(D)); biases keep torch default bound
        wo1=u(ks[8], (2 * D, O), 1 / math.sqrt(D)),      bo1=u(ks[9], (O,), 1 / math.sqrt(2 * D)),
        wo2=u(ks[10], (2 * D, O), 1 / math.sqrt(2 * D)), bo2=u(ks[11], (O,), 1 / math.sqrt(2 * D)),
    )


def pack_params(p, matmul_dtype=jnp.bfloat16):
    """Pack the 17 parameter tensors into 4 slabs (host-side, done once).

    Hidden width N and the head output are zero-padded to multiples of 128 lanes
    (numerically exact: leaky(0)=0, zero K-rows contribute nothing, padded head
    lanes are sliced off in the wrapper).  Weights are optionally cast to bf16.
    """
    D, N = p["w1a"].shape
    O = p["wo1"].shape[1]
    N_pad = _round_up(N, 128)
    O_pad = _round_up(2 * O, 128)

    padc = lambda w, c: jnp.pad(w, ((0, 0), (0, c - w.shape[1])))
    padr = lambda w, r: jnp.pad(w, ((0, r - w.shape[0]), (0, 0)))

    w_up = jnp.concatenate([padc(p["w1a"], N_pad), padc(p["w2a"], N_pad)],
                           axis=0).astype(matmul_dtype)                          # (3D, N_pad)
    w_dn = jnp.concatenate([padr(p["w1b"], N_pad), padr(p["w2b"], N_pad)],
                           axis=1).astype(matmul_dtype)                          # (N_pad, 3D)
    w_h = padc(jnp.concatenate([p["wo1"], p["wo2"]], axis=1),
               O_pad).astype(matmul_dtype)                                       # (2D, O_pad)

    wmax = max(N_pad, 2 * D, O_pad)
    row = lambda v: jnp.pad(v, (0, wmax - v.shape[0]))[None, :]
    b_slab = jnp.concatenate(
        [row(p["b1a"]), row(p["b1b"]), row(p["b2a"]), row(p["b2b"]),
         row(jnp.concatenate([p["bo1"], p["bo2"]]))], axis=0
    ).astype(jnp.float32)                                                        # (5, wmax)
    return w_up, w_dn, w_h, b_slab


def reference_forward(obs, p):
    """Pure-JAX reference mirroring the PyTorch forward."""
    x0 = obs
    x1 = _leaky(x0 + (_leaky(x0 @ p["w1a"] + p["b1a"]) @ p["w1b"] + p["b1b"]))
    xc = jnp.concatenate([x0, x1], -1)
    x2 = _leaky(xc + (_leaky(xc @ p["w2a"] + p["b2a"]) @ p["w2b"] + p["b2b"]))
    o1 = jax.nn.sigmoid(x2 @ p["wo1"] + p["bo1"])
    o2 = jnp.tanh(x2 @ p["wo2"] + p["bo2"])
    return jnp.concatenate([o1, o2], -1)


if __name__ == "__main__":
    # Small config: NetActor(in_dim=32, out_dim=9, n_neurons=64)
    B, IN_DIM, OUT_DIM, N_NEURONS = 8, 32, 9, 64
    OW = 2 * (OUT_DIM - 1)

    key = jax.random.PRNGKey(0)
    k_obs, k_params, k_obs2 = jax.random.split(key, 3)
    obs = jax.random.normal(k_obs, (B, IN_DIM), dtype=jnp.float32)
    params = init_params(k_params, IN_DIM, OUT_DIM, N_NEURONS)
    ref = reference_forward(obs, params)

    # 1) f32 MXU-operand path (numerically tight vs reference)
    slabs_f32 = pack_params(params, matmul_dtype=jnp.float32)
    out = jax.block_until_ready(net_actor_forward(obs, *slabs_f32, out_width=OW))
    assert out.shape == (B, OW), out.shape
    assert jnp.allclose(out, ref, atol=1e-5, rtol=1e-5), float(jnp.max(jnp.abs(out - ref)))

    # 2) Default bf16-slab path + bf16 lane-dense output; larger batch exercising a
    #    multi-tile "parallel" grid (v7x megacore) with a partial last tile.
    B2 = 200
    obs2 = jax.random.normal(k_obs2, (B2, IN_DIM), dtype=jnp.float32)
    ref2 = reference_forward(obs2, params)
    slabs_bf16 = pack_params(params)                         # default: bf16 matmul operands
    out2 = jax.block_until_ready(
        net_actor_forward(obs2, *slabs_bf16, out_width=OW, out_dtype=jnp.bfloat16))
    assert out2.shape == (B2, OW), out2.shape
    err2 = jnp.max(jnp.abs(out2.astype(jnp.float32) - ref2))
    assert jnp.allclose(out2.astype(jnp.float32), ref2, atol=5e-2, rtol=5e-2), float(err2)

    # 3) Large-D config exercising the concat-free K-split path (D >= 128)
    B3, D3, N3 = 64, 128, 256
    k3o, k3p = jax.random.split(jax.random.PRNGKey(1))
    obs3 = jax.random.normal(k3o, (B3, D3), dtype=jnp.float32)
    params3 = init_params(k3p, D3, OUT_DIM, N3)
    ref3 = reference_forward(obs3, params3)
    out3 = jax.block_until_ready(
        net_actor_forward(obs3, *pack_params(params3, matmul_dtype=jnp.float32), out_width=OW))
    assert out3.shape == (B3, OW), out3.shape
    assert jnp.allclose(out3, ref3, atol=1e-4, rtol=1e-4), float(jnp.max(jnp.abs(out3 - ref3)))

    print("KERNEL_OK")
</pallas_src>

<mosaic_0001>
module attributes {stable_mosaic.version = 11 : i64} {
  func.func @net_actor_kernel(%arg0: i32, %arg1: memref<8x32xf32, #tpu.memory_space<vmem>>, %arg2: memref<96x128xf32, #tpu.memory_space<vmem>>, %arg3: memref<128x96xf32, #tpu.memory_space<vmem>>, %arg4: memref<64x128xf32, #tpu.memory_space<vmem>>, %arg5: memref<5x128xf32, #tpu.memory_space<vmem>>, %arg6: memref<8x128xf32, #tpu.memory_space<vmem>>) attributes {dimension_semantics = [#tpu.dimension_semantics<parallel>], iteration_bounds = array<i64: 1>, scalar_prefetch = 0 : i64, scratch_operands = 0 : i64, tpu.core_type = #tpu.core_type<tc>, window_params = [{transform_indices = @transform_0, window_bounds = array<i64: 8, 32>}, {pipeline_mode = #tpu.pipeline_mode<synchronous>, transform_indices = @transform_1, window_bounds = array<i64: 96, 128>}, {pipeline_mode = #tpu.pipeline_mode<synchronous>, transform_indices = @transform_2, window_bounds = array<i64: 128, 96>}, {pipeline_mode = #tpu.pipeline_mode<synchronous>, transform_indices = @transform_3, window_bounds = array<i64: 64, 128>}, {pipeline_mode = #tpu.pipeline_mode<synchronous>, transform_indices = @transform_4, window_bounds = array<i64: 5, 128>}, {transform_indices = @transform_5, window_bounds = array<i64: 8, 128>}]} {
    %c0 = arith.constant 0 : index
    %c0_0 = arith.constant 0 : index
    %0 = vector.load %arg1[%c0, %c0_0] : memref<8x32xf32, #tpu.memory_space<vmem>>, vector<8x32xf32>
    %c0_1 = arith.constant 0 : index
    %c0_2 = arith.constant 0 : index
    %1 = vector.load %arg5[%c0_1, %c0_2] : memref<5x128xf32, #tpu.memory_space<vmem>>, vector<1x128xf32>
    %c1 = arith.constant 1 : index
    %c0_3 = arith.constant 0 : index
    %2 = vector.load %arg5[%c1, %c0_3] : memref<5x128xf32, #tpu.memory_space<vmem>>, vector<1x32xf32>
    %c2 = arith.constant 2 : index
    %c0_4 = arith.constant 0 : index
    %3 = vector.load %arg5[%c2, %c0_4] : memref<5x128xf32, #tpu.memory_space<vmem>>, vector<1x128xf32>
    %c4 = arith.constant 4 : index
    %c0_5 = arith.constant 0 : index
    %4 = vector.load %arg5[%c4, %c0_5] : memref<5x128xf32, #tpu.memory_space<vmem>>, vector<1x128xf32>
    %c0_6 = arith.constant 0 : index
    %c0_7 = arith.constant 0 : index
    %5 = vector.load %arg2[%c0_6, %c0_7] : memref<96x128xf32, #tpu.memory_space<vmem>>, vector<32x128xf32>
    %cst = arith.constant dense<0.000000e+00> : vector<8x128xf32>
    %6 = tpu.matmul %0, %5, %cst {dimension_numbers = #tpu.dot_dimension_numbers<[1], [0], [0], [1], [0, 0, 1, 1], [], []>} : vector<8x32xf32>, vector<32x128xf32>, vector<8x128xf32> -> vector<8x128xf32>
    %7 = vector.broadcast %1 : vector<1x128xf32> to vector<8x128xf32>
    %8 = arith.addf %6, %7 : vector<8x128xf32>
    %cst_8 = arith.constant 0.000000e+00 : f32
    %9 = vector.broadcast %cst_8 : f32 to vector<8x128xf32>
    %10 = arith.cmpf oge, %8, %9 : vector<8x128xf32>
    %cst_9 = arith.constant 2.000000e-01 : f32
    %11 = vector.broadcast %cst_9 : f32 to vector<8x128xf32>
    %12 = arith.mulf %11, %8 : vector<8x128xf32>
    %13 = arith.select %10, %8, %12 : vector<8x128xi1>, vector<8x128xf32>
    %c0_10 = arith.constant 0 : index
    %c0_11 = arith.constant 0 : index
    %14 = vector.load %arg3[%c0_10, %c0_11] : memref<128x96xf32, #tpu.memory_space<vmem>>, vector<128x32xf32>
    %cst_12 = arith.constant dense<0.000000e+00> : vector<8x32xf32>
    %15 = tpu.matmul %13, %14, %cst_12 {dimension_numbers = #tpu.dot_dimension_numbers<[1], [0], [0], [1], [0, 0, 1, 1], [], []>} : vector<8x128xf32>, vector<128x32xf32>, vector<8x32xf32> -> vector<8x32xf32>
    %16 = arith.addf %0, %15 : vector<8x32xf32>
    %17 = vector.broadcast %2 : vector<1x32xf32> to vector<8x32xf32>
    %18 = arith.addf %16, %17 : vector<8x32xf32>
    %cst_13 = arith.constant 0.000000e+00 : f32
    %19 = vector.broadcast %cst_13 : f32 to vector<8x32xf32>
    %20 = arith.cmpf oge, %18, %19 : vector<8x32xf32>
    %cst_14 = arith.constant 2.000000e-01 : f32
    %21 = vector.broadcast %cst_14 : f32 to vector<8x32xf32>
    %22 = arith.mulf %21, %18 : vector<8x32xf32>
    %23 = arith.select %20, %18, %22 : vector<8x32xi1>, vector<8x32xf32>
    %24 = tpu.concatenate %0, %23 in 1 : vector<8x32xf32>, vector<8x32xf32> -> vector<8x64xf32>
    %c3 = arith.constant 3 : index
    %c0_15 = arith.constant 0 : index
    %25 = vector.load %arg5[%c3, %c0_15] : memref<5x128xf32, #tpu.memory_space<vmem>>, vector<1x64xf32>
    %c32 = arith.constant 32 : index
    %c0_16 = arith.constant 0 : index
    %26 = vector.load %arg2[%c32, %c0_16] : memref<96x128xf32, #tpu.memory_space<vmem>>, vector<64x128xf32>
    %cst_17 = arith.constant dense<0.000000e+00> : vector<8x128xf32>
    %27 = tpu.matmul %24, %26, %cst_17 {dimension_numbers = #tpu.dot_dimension_numbers<[1], [0], [0], [1], [0, 0, 1, 1], [], []>} : vector<8x64xf32>, vector<64x128xf32>, vector<8x128xf32> -> vector<8x128xf32>
    %28 = vector.broadcast %3 : vector<1x128xf32> to vector<8x128xf32>
    %29 = arith.addf %27, %28 : vector<8x128xf32>
    %cst_18 = arith.constant 0.000000e+00 : f32
    %30 = vector.broadcast %cst_18 : f32 to vector<8x128xf32>
    %31 = arith.cmpf oge, %29, %30 : vector<8x128xf32>
    %cst_19 = arith.constant 2.000000e-01 : f32
    %32 = vector.broadcast %cst_19 : f32 to vector<8x128xf32>
    %33 = arith.mulf %32, %29 : vector<8x128xf32>
    %34 = arith.select %31, %29, %33 : vector<8x128xi1>, vector<8x128xf32>
    %c0_20 = arith.constant 0 : index
    %c32_21 = arith.constant 32 : index
    %35 = vector.load %arg3[%c0_20, %c32_21] : memref<128x96xf32, #tpu.memory_space<vmem>>, vector<128x64xf32>
    %cst_22 = arith.constant dense<0.000000e+00> : vector<8x64xf32>
    %36 = tpu.matmul %34, %35, %cst_22 {dimension_numbers = #tpu.dot_dimension_numbers<[1], [0], [0], [1], [0, 0, 1, 1], [], []>} : vector<8x128xf32>, vector<128x64xf32>, vector<8x64xf32> -> vector<8x64xf32>
    %37 = arith.addf %24, %36 : vector<8x64xf32>
    %38 = vector.broadcast %25 : vector<1x64xf32> to vector<8x64xf32>
    %39 = arith.addf %37, %38 : vector<8x64xf32>
    %cst_23 = arith.constant 0.000000e+00 : f32
    %40 = vector.broadcast %cst_23 : f32 to vector<8x64xf32>
    %41 = arith.cmpf oge, %39, %40 : vector<8x64xf32>
    %cst_24 = arith.constant 2.000000e-01 : f32
    %42 = vector.broadcast %cst_24 : f32 to vector<8x64xf32>
    %43 = arith.mulf %42, %39 : vector<8x64xf32>
    %44 = arith.select %41, %39, %43 : vector<8x64xi1>, vector<8x64xf32>
    %c0_25 = arith.constant 0 : index
    %c0_26 = arith.constant 0 : index
    %45 = vector.load %arg4[%c0_25, %c0_26] : memref<64x128xf32, #tpu.memory_space<vmem>>, vector<64x128xf32>
    %cst_27 = arith.constant dense<0.000000e+00> : vector<8x128xf32>
    %46 = tpu.matmul %44, %45, %cst_27 {dimension_numbers = #tpu.dot_dimension_numbers<[1], [0], [0], [1], [0, 0, 1, 1], [], []>} : vector<8x64xf32>, vector<64x128xf32>, vector<8x128xf32> -> vector<8x128xf32>
    %47 = vector.broadcast %4 : vector<1x128xf32> to vector<8x128xf32>
    %48 = arith.addf %46, %47 : vector<8x128xf32>
    %49 = tpu.iota {dimensions = array<i32: 1>} : vector<8x128xi32>
    %c8_i32 = arith.constant 8 : i32
    %50 = vector.broadcast %c8_i32 : i32 to vector<8x128xi32>
    %51 = arith.cmpi slt, %49, %50 : vector<8x128xi32>
    %cst_28 = arith.constant 2.000000e+00 : f32
    %52 = vector.broadcast %cst_28 : f32 to vector<8x128xf32>
    %53 = arith.mulf %52, %48 : vector<8x128xf32>
    %54 = arith.select %51, %48, %53 : vector<8x128xi1>, vector<8x128xf32>
    %55 = arith.negf %54 : vector<8x128xf32>
    %56 = math.exp %55 : vector<8x128xf32>
    %cst_29 = arith.constant 1.000000e+00 : f32
    %57 = vector.broadcast %cst_29 : f32 to vector<8x128xf32>
    %58 = arith.addf %57, %56 : vector<8x128xf32>
    %59 = arith.divf %57, %58 : vector<8x128xf32>
    %cst_30 = arith.constant 2.000000e+00 : f32
    %60 = vector.broadcast %cst_30 : f32 to vector<8x128xf32>
    %61 = arith.mulf %60, %59 : vector<8x128xf32>
    %cst_31 = arith.constant 1.000000e+00 : f32
    %62 = vector.broadcast %cst_31 : f32 to vector<8x128xf32>
    %63 = arith.subf %61, %62 : vector<8x128xf32>
    %64 = arith.select %51, %59, %63 : vector<8x128xi1>, vector<8x128xf32>
    %c0_32 = arith.constant 0 : index
    %c0_33 = arith.constant 0 : index
    %65 = vector.load %arg6[%c0_32, %c0_33] : memref<8x128xf32, #tpu.memory_space<vmem>>, vector<8x128xf32>
    tpu.vector_store %arg6[%c0_32, %c0_33], %64 {strides = array<i32>} : memref<8x128xf32, #tpu.memory_space<vmem>>, vector<8x128xf32>,
    return
  }
  func.func @transform_0(%arg0: i32) -> (i32, i32) {
    %c0_i32 = arith.constant 0 : i32
    %c0_i32_0 = arith.constant 0 : i32
    return %arg0, %c0_i32 : i32, i32
  }
  func.func @transform_1(%arg0: i32) -> (i32, i32) {
    %c0_i32 = arith.constant 0 : i32
    %c0_i32_0 = arith.constant 0 : i32
    %c0_i32_1 = arith.constant 0 : i32
    return %c0_i32, %c0_i32_0 : i32, i32
  }
  func.func @transform_2(%arg0: i32) -> (i32, i32) {
    %c0_i32 = arith.constant 0 : i32
    %c0_i32_0 = arith.constant 0 : i32
    %c0_i32_1 = arith.constant 0 : i32
    return %c0_i32, %c0_i32_0 : i32, i32
  }
  func.func @transform_3(%arg0: i32) -> (i32, i32) {
    %c0_i32 = arith.constant 0 : i32
    %c0_i32_0 = arith.constant 0 : i32
    %c0_i32_1 = arith.constant 0 : i32
    return %c0_i32, %c0_i32_0 : i32, i32
  }
  func.func @transform_4(%arg0: i32) -> (i32, i32) {
    %c0_i32 = arith.constant 0 : i32
    %c0_i32_0 = arith.constant 0 : i32
    %c0_i32_1 = arith.constant 0 : i32
    return %c0_i32, %c0_i32_0 : i32, i32
  }
  func.func @transform_5(%arg0: i32) -> (i32, i32) {
    %c0_i32 = arith.constant 0 : i32
    %c0_i32_0 = arith.constant 0 : i32
    return %arg0, %c0_i32 : i32, i32
  }
}

</mosaic_0001>

<llo_original>
// kernel: net_actor_forward.1
$region0: #{net_actor_forward.1}
  #allocation0 [shape = 'u32[]', space=smem, size = 0x4, offset = 0x4, fixed_abs, tag = 'smem constant byte address 0x4 - core index']
  #allocation1 [shape = 'u32[144,128]{1,0:T(1,128)}', space=vmem, size = 0x12000, scoped, tag = 'internal scratch']
  %s0 = inlined_call_operand.vmem [shape: f32[8,32], index: 0, kind: input, shape index: {}]
  %s1 = inlined_call_operand.vmem [shape: f32[96,128], index: 1, kind: input, shape index: {}]
  %s2 = inlined_call_operand.vmem [shape: f32[128,96], index: 2, kind: input, shape index: {}]
  %s3 = inlined_call_operand.vmem [shape: f32[64,128], index: 3, kind: input, shape index: {}]
  %s4 = inlined_call_operand.vmem [shape: f32[5,128], index: 4, kind: input, shape index: {}]
  %s5 = inlined_call_operand.hbm [shape: f32[8,128], index: 5, kind: output, shape index: {}]
  %s6 = sld [smem:[#allocation0]]
  $region30: #{net_actor_forward.1} parent=0
    _
  %s8 = ssub.s32 1, %s6
  %s9 = scalar_select 0, %s8, %s6
  $region1: #{net_actor_forward.1} parent=0
    #allocation2 [shape = 'u8[4096]{0}', space=vmem, size = 0x1000, scoped, tag = 'output window, operand 0, single buffered']
    #allocation3 [shape = 's32[1]{0}', space=sflag, size = 0x4, scoped, tag = 'scoped memory for net_actor_forward.1']
    %10 = vsyncpa [#allocation3], 0
    // Predicated region
    $region2: #{net_actor_forward.1} parent=1 // pred_check
      _
    $region3: #{net_actor_forward.1} parent=1 // pred_check_branch
      %12 = sbr.rel (0) target = $region5
    $region4: #{net_actor_forward.1} parent=1 // pred_region
      _
    $region5: #{net_actor_forward.1} parent=1 // pred_fallthru
      _
    // Predicated region
    $region6: #{net_actor_forward.1} parent=1 // pred_check
      _
    $region7: #{net_actor_forward.1} parent=1 // pred_check_branch
      %14 = sbr.rel (0) target = $region9
    $region8: #{net_actor_forward.1} parent=1 // pred_region
      _
    $region9: #{net_actor_forward.1} parent=1 // pred_fallthru
      _
    // Predicated region
    $region10: #{net_actor_forward.1} parent=1 // pred_check
      _
    $region11: #{net_actor_forward.1} parent=1 // pred_check_branch
      %16 = sbr.rel (0) target = $region13
    $region12: #{net_actor_forward.1} parent=1 // pred_region
      _
    $region13: #{net_actor_forward.1} parent=1 // pred_fallthru
      _
    // Predicated region
    $region14: #{net_actor_forward.1} parent=1 // pred_check
      _
    $region15: #{net_actor_forward.1} parent=1 // pred_check_branch
      %18 = sbr.rel (0) target = $region17
    $region16: #{net_actor_forward.1} parent=1 // pred_region
      _
    $region17: #{net_actor_forward.1} parent=1 // pred_fallthru
      _
    // Predicated region
    $region18: #{net_actor_forward.1} parent=1 // pred_check
      _
    $region19: #{net_actor_forward.1} parent=1 // pred_check_branch
      %20 = sbr.rel (0) target = $region21
    $region20: #{net_actor_forward.1} parent=1 // pred_region
      _
    $region21: #{net_actor_forward.1} parent=1 // pred_fallthru
      _
    %v21 = vld [vmem:[%s0] sm:$0xff]
    %v22 = vld [vmem:[%s4] sm:$0x1]
    %v23 = vld [vmem:[%s4 + $0x1] sm:$0x1]
    %v24 = vld [vmem:[%s4 + $0x2] sm:$0x1]
    %v25 = vld [vmem:[%s4 + $0x4] sm:$0x1]
    %v26 = vld [vmem:[%s1] sm:$0xff]
    %v27 = vld [vmem:[%s1 + $0x8] sm:$0xff]
    %v28 = vld [vmem:[%s1 + $0x10] sm:$0xff]
    %v29 = vld [vmem:[%s1 + $0x18] sm:$0xff]
    %v30 = vlaneseq
    %v31 = vshrl.u32 %v30, 7
    %v32 = vsub.s32 0, %v31
    %v33 = vrot.slane %v22, %v32
    %vm34 = vcmask 261120
    %v36 = vsel %vm34, %v21, 0
    %38 = vmatprep.subr.mxu0 0.0
    %39 = vmatpush1.msra.mxu0 %v26
    %40 = vmatprep.subr.mxu0 0.0
    %41 = vmatpush1.msra.mxu0 %v27
    %42 = vmatprep.subr.mxu0 0.0
    %43 = vmatpush1.msra.mxu0 %v28
    %44 = vmatprep.subr.mxu0 0.0
    %45 = vmatpush1.msra.mxu0 %v29
    %46 = vmatprep.subr.mxu0 0.0
    %47 = vmatpush1.msra.mxu0 0.0
    %48 = vmatprep.subr.mxu0 0.0
    %49 = vmatpush1.msra.mxu0 0.0
    %50 = vmatprep.subr.mxu0 0.0
    %51 = vmatpush1.msra.mxu0 0.0
    %52 = vmatprep.subr.mxu0 0.0
    %53 = vmatpush1.msra.mxu0 0.0
    %54 = vmatprep.subr.mxu0 0.0
    %55 = vmatpush1.msra.mxu0 0.0
    %56 = vmatprep.subr.mxu0 0.0
    %57 = vmatpush1.msra.mxu0 0.0
    %58 = vmatprep.subr.mxu0 0.0
    %59 = vmatpush1.msra.mxu0 0.0
    %60 = vmatprep.subr.mxu0 0.0
    %61 = vmatpush1.msra.mxu0 0.0
    %62 = vmatprep.subr.mxu0 0.0
    %63 = vmatpush1.msra.mxu0 0.0
    %64 = vmatprep.subr.mxu0 0.0
    %65 = vmatpush1.msra.mxu0 0.0
    %66 = vmatprep.subr.mxu0 0.0
    %67 = vmatpush1.msra.mxu0 0.0
    %68 = vmatprep.subr.mxu0 0.0
    %69 = vmatpush1.msra.mxu0 0.0
    %70 = vmatprep.subr.mxu0 0.0
    %71 = vmatpush1.msra.mxu0 0.0
    %72 = vmatprep.subr.mxu0 0.0
    %73 = vmatpush1.msra.mxu0 0.0
    %74 = vmatprep.subr.mxu0 0.0
    %75 = vmatpush1.msra.mxu0 0.0
    %76 = vmatprep.subr.mxu0 0.0
    %77 = vmatpush1.msra.mxu0 0.0
    %78 = vmatprep.subr.mxu0 0.0
    %79 = vmatpush1.msra.mxu0 0.0
    %80 = vmatprep.subr.mxu0 0.0
    %81 = vmatpush1.msra.mxu0 0.0
    %82 = vmatprep.subr.mxu0 0.0
    %83 = vmatpush1.msra.mxu0 0.0
    %84 = vmatprep.subr.mxu0 0.0
    %85 = vmatpush1.msra.mxu0 0.0
    %86 = vmatprep.subr.mxu0 0.0
    %87 = vmatpush1.msra.mxu0 0.0
    %88 = vmatprep.subr.mxu0 0.0
    %89 = vmatpush1.msra.mxu0 0.0
    %90 = vmatprep.subr.mxu0 0.0
    %91 = vmatpush1.msra.mxu0 0.0
    %92 = vmatprep.subr.mxu0 0.0
    %93 = vmatpush1.msra.mxu0 0.0
    %94 = vmatprep.subr.mxu0 0.0
    %95 = vmatpush1.msra.mxu0 0.0
    %96 = vmatprep.subr.mxu0 0.0
    %97 = vmatpush1.msra.mxu0 0.0
    %98 = vmatprep.subr.mxu0 0.0
    %99 = vmatpush1.msra.mxu0 0.0
    %100 = vmatprep.subr.mxu0 0.0
    %101 = vmatpush1.msra.mxu0 0.0
    %102 = vmatprep.mubr.f32.mxu0 0.0
    %103 = vmatmul.mubr.f32.gmra.mrb[0].mxu0 %v36
    %v104 = vpop.f32.mrb[0].mxu0
    %v105 = vadd.f32 %v33, %v104
    %v106 = vpop.f32.mrb[0].mxu0
    %107 = vdwg.mxu0
    %vm108 = vcmp.ge.f32.partialorder %v105, 0.0
    %v109 = vmul.f32 %v105, 0.2
    %v110 = vsel %vm108, %v105, %v109
    %v111 = vld [vmem:[%s2] sm:$0xff]
    %v112 = vld [vmem:[%s2 + $0x8] sm:$0xff]
    %v113 = vld [vmem:[%s2 + $0x10] sm:$0xff]
    %v114 = vld [vmem:[%s2 + $0x18] sm:$0xff]
    %v115 = vld [vmem:[%s2 + $0x20] sm:$0xff]
    %v116 = vld [vmem:[%s2 + $0x28] sm:$0xff]
    %v117 = vld [vmem:[%s2 + $0x30] sm:$0xff]
    %v118 = vld [vmem:[%s2 + $0x38] sm:$0xff]
    %v119 = vld [vmem:[%s2 + $0x40] sm:$0xff]
    %v120 = vld [vmem:[%s2 + $0x48] sm:$0xff]
    %v121 = vld [vmem:[%s2 + $0x50] sm:$0xff]
    %v122 = vld [vmem:[%s2 + $0x58] sm:$0xff]
    %v123 = vld [vmem:[%s2 + $0x60] sm:$0xff]
    %v124 = vld [vmem:[%s2 + $0x68] sm:$0xff]
    %v125 = vld [vmem:[%s2 + $0x70] sm:$0xff]
    %v126 = vld [vmem:[%s2 + $0x78] sm:$0xff]
    %127 = vmatprep.subr.mxu0 0.0
    %128 = vmatpush1.msra.mxu0 %v111
    %129 = vmatprep.subr.mxu0 0.0
    %130 = vmatpush1.msra.mxu0 %v112
    %131 = vmatprep.subr.mxu0 0.0
    %132 = vmatpush1.msra.mxu0 %v113
    %133 = vmatprep.subr.mxu0 0.0
    %134 = vmatpush1.msra.mxu0 %v114
    %135 = vmatprep.subr.mxu0 0.0
    %136 = vmatpush1.msra.mxu0 %v115
    %137 = vmatprep.subr.mxu0 0.0
    %138 = vmatpush1.msra.mxu0 %v116
    %139 = vmatprep.subr.mxu0 0.0
    %140 = vmatpush1.msra.mxu0 %v117
    %141 = vmatprep.subr.mxu0 0.0
    %142 = vmatpush1.msra.mxu0 %v118
    %143 = vmatprep.subr.mxu0 0.0
    %144 = vmatpush1.msra.mxu0 %v119
    %145 = vmatprep.subr.mxu0 0.0
    %146 = vmatpush1.msra.mxu0 %v120
    %147 = vmatprep.subr.mxu0 0.0
    %148 = vmatpush1.msra.mxu0 %v121
    %149 = vmatprep.subr.mxu0 0.0
    %150 = vmatpush1.msra.mxu0 %v122
    %151 = vmatprep.subr.mxu0 0.0
    %152 = vmatpush1.msra.mxu0 %v123
    %153 = vmatprep.subr.mxu0 0.0
    %154 = vmatpush1.msra.mxu0 %v124
    %155 = vmatprep.subr.mxu0 0.0
    %156 = vmatpush1.msra.mxu0 %v125
    %157 = vmatprep.subr.mxu0 0.0
    %158 = vmatpush1.msra.mxu0 %v126
    %159 = vmatprep.subr.mxu0 0.0
    %160 = vmatpush1.msra.mxu0 0.0
    %161 = vmatprep.subr.mxu0 0.0
    %162 = vmatpush1.msra.mxu0 0.0
    %163 = vmatprep.subr.mxu0 0.0
    %164 = vmatpush1.msra.mxu0 0.0
    %165 = vmatprep.subr.mxu0 0.0
    %166 = vmatpush1.msra.mxu0 0.0
    %167 = vmatprep.subr.mxu0 0.0
    %168 = vmatpush1.msra.mxu0 0.0
    %169 = vmatprep.subr.mxu0 0.0
    %170 = vmatpush1.msra.mxu0 0.0
    %171 = vmatprep.subr.mxu0 0.0
    %172 = vmatpush1.msra.mxu0 0.0
    %173 = vmatprep.subr.mxu0 0.0
    %174 = vmatpush1.msra.mxu0 0.0
    %175 = vmatprep.subr.mxu0 0.0
    %176 = vmatpush1.msra.mxu0 0.0
    %177 = vmatprep.subr.mxu0 0.0
    %178 = vmatpush1.msra.mxu0 0.0
    %179 = vmatprep.subr.mxu0 0.0
    %180 = vmatpush1.msra.mxu0 0.0
    %181 = vmatprep.subr.mxu0 0.0
    %182 = vmatpush1.msra.mxu0 0.0
    %183 = vmatprep.subr.mxu0 0.0
    %184 = vmatpush1.msra.mxu0 0.0
    %185 = vmatprep.subr.mxu0 0.0
    %186 = vmatpush1.msra.mxu0 0.0
    %187 = vmatprep.subr.mxu0 0.0
    %188 = vmatpush1.msra.mxu0 0.0
    %189 = vmatprep.subr.mxu0 0.0
    %190 = vmatpush1.msra.mxu0 0.0
    %191 = vmatprep.mubr.f32.mxu0 0.0
    %192 = vmatmul.mubr.f32.gmra.mrb[0].mxu0 %v110
    %v193 = vpop.f32.mrb[0].mxu0
    %v194 = vadd.f32 0.0, %v193
    %v195 = vpop.f32.mrb[0].mxu0
    %196 = vdwg.mxu0
    %v197 = vadd.f32 %v21, %v194
    %v198 = vlaneseq
    %v199 = vshrl.u32 %v198, 7
    %v200 = vsub.s32 0, %v199
    %v201 = vrot.slane %v23, %v200
    %v202 = vadd.f32 %v197, %v201
    %vm203 = vcmp.ge.f32.partialorder %v202, 0.0
    %v204 = vmul.f32 %v202, 0.2
    %v205 = vsel %vm203, %v202, %v204
    %207 = vrot.lane.b32.xlu0 %v205, 32
    %v208 = vpop.permute.xlu0 %207
    %v210 = vsel %vm34, %v21, %v208
    %v211 = vld [vmem:[%s4 + $0x3] sm:$0x1]
    %v212 = vld [vmem:[%s1 + $0x20] sm:$0xff]
    %v213 = vld [vmem:[%s1 + $0x28] sm:$0xff]
    %v214 = vld [vmem:[%s1 + $0x30] sm:$0xff]
    %v215 = vld [vmem:[%s1 + $0x38] sm:$0xff]
    %v216 = vld [vmem:[%s1 + $0x40] sm:$0xff]
    %v217 = vld [vmem:[%s1 + $0x48] sm:$0xff]
    %v218 = vld [vmem:[%s1 + $0x50] sm:$0xff]
    %v219 = vld [vmem:[%s1 + $0x58] sm:$0xff]
    %v220 = vlaneseq
    %v221 = vshrl.u32 %v220, 7
    %v222 = vsub.s32 0, %v221
    %v223 = vrot.slane %v24, %v222
    %vm224 = vcmask 523264
    %v226 = vsel %vm224, %v210, 0
    %228 = vmatprep.subr.mxu0 0.0
    %229 = vmatpush1.msra.mxu0 %v212
    %230 = vmatprep.subr.mxu0 0.0
    %231 = vmatpush1.msra.mxu0 %v213
    %232 = vmatprep.subr.mxu0 0.0
    %233 = vmatpush1.msra.mxu0 %v214
    %234 = vmatprep.subr.mxu0 0.0
    %235 = vmatpush1.msra.mxu0 %v215
    %236 = vmatprep.subr.mxu0 0.0
    %237 = vmatpush1.msra.mxu0 %v216
    %238 = vmatprep.subr.mxu0 0.0
    %239 = vmatpush1.msra.mxu0 %v217
    %240 = vmatprep.subr.mxu0 0.0
    %241 = vmatpush1.msra.mxu0 %v218
    %242 = vmatprep.subr.mxu0 0.0
    %243 = vmatpush1.msra.mxu0 %v219
    %244 = vmatprep.subr.mxu0 0.0
    %245 = vmatpush1.msra.mxu0 0.0
    %246 = vmatprep.subr.mxu0 0.0
    %247 = vmatpush1.msra.mxu0 0.0
    %248 = vmatprep.subr.mxu0 0.0
    %249 = vmatpush1.msra.mxu0 0.0
    %250 = vmatprep.subr.mxu0 0.0
    %251 = vmatpush1.msra.mxu0 0.0
    %252 = vmatprep.subr.mxu0 0.0
    %253 = vmatpush1.msra.mxu0 0.0
    %254 = vmatprep.subr.mxu0 0.0
    %255 = vmatpush1.msra.mxu0 0.0
    %256 = vmatprep.subr.mxu0 0.0
    %257 = vmatpush1.msra.mxu0 0.0
    %258 = vmatprep.subr.mxu0 0.0
    %259 = vmatpush1.msra.mxu0 0.0
    %260 = vmatprep.subr.mxu0 0.0
    %261 = vmatpush1.msra.mxu0 0.0
    %262 = vmatprep.subr.mxu0 0.0
    %263 = vmatpush1.msra.mxu0 0.0
    %264 = vmatprep.subr.mxu0 0.0
    %265 = vmatpush1.msra.mxu0 0.0
    %266 = vmatprep.subr.mxu0 0.0
    %267 = vmatpush1.msra.mxu0 0.0
    %268 = vmatprep.subr.mxu0 0.0
    %269 = vmatpush1.msra.mxu0 0.0
    %270 = vmatprep.subr.mxu0 0.0
    %271 = vmatpush1.msra.mxu0 0.0
    %272 = vmatprep.subr.mxu0 0.0
    %273 = vmatpush1.msra.mxu0 0.0
    %274 = vmatprep.subr.mxu0 0.0
    %275 = vmatpush1.msra.mxu0 0.0
    %276 = vmatprep.subr.mxu0 0.0
    %277 = vmatpush1.msra.mxu0 0.0
    %278 = vmatprep.subr.mxu0 0.0
    %279 = vmatpush1.msra.mxu0 0.0
    %280 = vmatprep.subr.mxu0 0.0
    %281 = vmatpush1.msra.mxu0 0.0
    %282 = vmatprep.subr.mxu0 0.0
    %283 = vmatpush1.msra.mxu0 0.0
    %284 = vmatprep.subr.mxu0 0.0
    %285 = vmatpush1.msra.mxu0 0.0
    %286 = vmatprep.subr.mxu0 0.0
    %287 = vmatpush1.msra.mxu0 0.0
    %288 = vmatprep.subr.mxu0 0.0
    %289 = vmatpush1.msra.mxu0 0.0
    %290 = vmatprep.subr.mxu0 0.0
    %291 = vmatpush1.msra.mxu0 0.0
    %292 = vmatprep.mubr.f32.mxu0 0.0
    %293 = vmatmul.mubr.f32.gmra.mrb[0].mxu0 %v226
    %v294 = vpop.f32.mrb[0].mxu0
    %v295 = vadd.f32 %v223, %v294
    %v296 = vpop.f32.mrb[0].mxu0
    %297 = vdwg.mxu0
    %vm298 = vcmp.ge.f32.partialorder %v295, 0.0
    %v299 = vmul.f32 %v295, 0.2
    %v300 = vsel %vm298, %v295, %v299
    %317 = vrot.lane.b32.xlu0 %v111, 96
    %v318 = vpop.permute.xlu0 %317
    %319 = vrot.lane.b32.xlu0 %v112, 96
    %v320 = vpop.permute.xlu0 %319
    %321 = vrot.lane.b32.xlu0 %v113, 96
    %v322 = vpop.permute.xlu0 %321
    %323 = vrot.lane.b32.xlu0 %v114, 96
    %v324 = vpop.permute.xlu0 %323
    %325 = vrot.lane.b32.xlu0 %v115, 96
    %v326 = vpop.permute.xlu0 %325
    %327 = vrot.lane.b32.xlu0 %v116, 96
    %v328 = vpop.permute.xlu0 %327
    %329 = vrot.lane.b32.xlu0 %v117, 96
    %v330 = vpop.permute.xlu0 %329
    %331 = vrot.lane.b32.xlu0 %v118, 96
    %v332 = vpop.permute.xlu0 %331
    %333 = vrot.lane.b32.xlu0 %v119, 96
    %v334 = vpop.permute.xlu0 %333
    %335 = vrot.lane.b32.xlu0 %v120, 96
    %v336 = vpop.permute.xlu0 %335
    %337 = vrot.lane.b32.xlu0 %v121, 96
    %v338 = vpop.permute.xlu0 %337
    %339 = vrot.lane.b32.xlu0 %v122, 96
    %v340 = vpop.permute.xlu0 %339
    %341 = vrot.lane.b32.xlu0 %v123, 96
    %v342 = vpop.permute.xlu0 %341
    %343 = vrot.lane.b32.xlu0 %v124, 96
    %v344 = vpop.permute.xlu0 %343
    %345 = vrot.lane.b32.xlu0 %v125, 96
    %v346 = vpop.permute.xlu0 %345
    %347 = vrot.lane.b32.xlu0 %v126, 96
    %v348 = vpop.permute.xlu0 %347
    %365 = vmatprep.subr.mxu0 0.0
    %366 = vmatpush1.msra.mxu0 %v318
    %367 = vmatprep.subr.mxu0 0.0
    %368 = vmatpush1.msra.mxu0 %v320
    %369 = vmatprep.subr.mxu0 0.0
    %370 = vmatpush1.msra.mxu0 %v322
    %371 = vmatprep.subr.mxu0 0.0
    %372 = vmatpush1.msra.mxu0 %v324
    %373 = vmatprep.subr.mxu0 0.0
    %374 = vmatpush1.msra.mxu0 %v326
    %375 = vmatprep.subr.mxu0 0.0
    %376 = vmatpush1.msra.mxu0 %v328
    %377 = vmatprep.subr.mxu0 0.0
    %378 = vmatpush1.msra.mxu0 %v330
    %379 = vmatprep.subr.mxu0 0.0
    %380 = vmatpush1.msra.mxu0 %v332
    %381 = vmatprep.subr.mxu0 0.0
    %382 = vmatpush1.msra.mxu0 %v334
    %383 = vmatprep.subr.mxu0 0.0
    %384 = vmatpush1.msra.mxu0 %v336
    %385 = vmatprep.subr.mxu0 0.0
    %386 = vmatpush1.msra.mxu0 %v338
    %387 = vmatprep.subr.mxu0 0.0
    %388 = vmatpush1.msra.mxu0 %v340
    %389 = vmatprep.subr.mxu0 0.0
    %390 = vmatpush1.msra.mxu0 %v342
    %391 = vmatprep.subr.mxu0 0.0
    %392 = vmatpush1.msra.mxu0 %v344
    %393 = vmatprep.subr.mxu0 0.0
    %394 = vmatpush1.msra.mxu0 %v346
    %395 = vmatprep.subr.mxu0 0.0
    %396 = vmatpush1.msra.mxu0 %v348
    %397 = vmatprep.subr.mxu0 0.0
    %398 = vmatpush1.msra.mxu0 0.0
    %399 = vmatprep.subr.mxu0 0.0
    %400 = vmatpush1.msra.mxu0 0.0
    %401 = vmatprep.subr.mxu0 0.0
    %402 = vmatpush1.msra.mxu0 0.0
    %403 = vmatprep.subr.mxu0 0.0
    %404 = vmatpush1.msra.mxu0 0.0
    %405 = vmatprep.subr.mxu0 0.0
    %406 = vmatpush1.msra.mxu0 0.0
    %407 = vmatprep.subr.mxu0 0.0
    %408 = vmatpush1.msra.mxu0 0.0
    %409 = vmatprep.subr.mxu0 0.0
    %410 = vmatpush1.msra.mxu0 0.0
    %411 = vmatprep.subr.mxu0 0.0
    %412 = vmatpush1.msra.mxu0 0.0
    %413 = vmatprep.subr.mxu0 0.0
    %414 = vmatpush1.msra.mxu0 0.0
    %415 = vmatprep.subr.mxu0 0.0
    %416 = vmatpush1.msra.mxu0 0.0
    %417 = vmatprep.subr.mxu0 0.0
    %418 = vmatpush1.msra.mxu0 0.0
    %419 = vmatprep.subr.mxu0 0.0
    %420 = vmatpush1.msra.mxu0 0.0
    %421 = vmatprep.subr.mxu0 0.0
    %422 = vmatpush1.msra.mxu0 0.0
    %423 = vmatprep.subr.mxu0 0.0
    %424 = vmatpush1.msra.mxu0 0.0
    %425 = vmatprep.subr.mxu0 0.0
    %426 = vmatpush1.msra.mxu0 0.0
    %427 = vmatprep.subr.mxu0 0.0
    %428 = vmatpush1.msra.mxu0 0.0
    %429 = vmatprep.mubr.f32.mxu0 0.0
    %430 = vmatmul.mubr.f32.gmra.mrb[0].mxu0 %v300
    %v431 = vpop.f32.mrb[0].mxu0
    %v432 = vadd.f32 0.0, %v431
    %v433 = vpop.f32.mrb[0].mxu0
    %434 = vdwg.mxu0
    %v435 = vadd.f32 %v210, %v432
    %v436 = vlaneseq
    %v437 = vshrl.u32 %v436, 7
    %v438 = vsub.s32 0, %v437
    %v439 = vrot.slane %v211, %v438
    %v440 = vadd.f32 %v435, %v439
    %vm441 = vcmp.ge.f32.partialorder %v440, 0.0
    %v442 = vmul.f32 %v440, 0.2
    %v443 = vsel %vm441, %v440, %v442
    %v444 = vld [vmem:[%s3] sm:$0xff]
    %v445 = vld [vmem:[%s3 + $0x8] sm:$0xff]
    %v446 = vld [vmem:[%s3 + $0x10] sm:$0xff]
    %v447 = vld [vmem:[%s3 + $0x18] sm:$0xff]
    %v448 = vld [vmem:[%s3 + $0x20] sm:$0xff]
    %v449 = vld [vmem:[%s3 + $0x28] sm:$0xff]
    %v450 = vld [vmem:[%s3 + $0x30] sm:$0xff]
    %v451 = vld [vmem:[%s3 + $0x38] sm:$0xff]
    %v452 = vlaneseq
    %v453 = vshrl.u32 %v452, 7
    %v454 = vsub.s32 0, %v453
    %v455 = vrot.slane %v25, %v454
    %v457 = vsel %vm224, %v443, 0
    %459 = vmatprep.subr.mxu0 0.0
    %460 = vmatpush1.msra.mxu0 %v444
    %461 = vmatprep.subr.mxu0 0.0
    %462 = vmatpush1.msra.mxu0 %v445
    %463 = vmatprep.subr.mxu0 0.0
    %464 = vmatpush1.msra.mxu0 %v446
    %465 = vmatprep.subr.mxu0 0.0
    %466 = vmatpush1.msra.mxu0 %v447
    %467 = vmatprep.subr.mxu0 0.0
    %468 = vmatpush1.msra.mxu0 %v448
    %469 = vmatprep.subr.mxu0 0.0
    %470 = vmatpush1.msra.mxu0 %v449
    %471 = vmatprep.subr.mxu0 0.0
    %472 = vmatpush1.msra.mxu0 %v450
    %473 = vmatprep.subr.mxu0 0.0
    %474 = vmatpush1.msra.mxu0 %v451
    %475 = vmatprep.subr.mxu0 0.0
    %476 = vmatpush1.msra.mxu0 0.0
    %477 = vmatprep.subr.mxu0 0.0
    %478 = vmatpush1.msra.mxu0 0.0
    %479 = vmatprep.subr.mxu0 0.0
    %480 = vmatpush1.msra.mxu0 0.0
    %481 = vmatprep.subr.mxu0 0.0
    %482 = vmatpush1.msra.mxu0 0.0
    %483 = vmatprep.subr.mxu0 0.0
    %484 = vmatpush1.msra.mxu0 0.0
    %485 = vmatprep.subr.mxu0 0.0
    %486 = vmatpush1.msra.mxu0 0.0
    %487 = vmatprep.subr.mxu0 0.0
    %488 = vmatpush1.msra.mxu0 0.0
    %489 = vmatprep.subr.mxu0 0.0
    %490 = vmatpush1.msra.mxu0 0.0
    %491 = vmatprep.subr.mxu0 0.0
    %492 = vmatpush1.msra.mxu0 0.0
    %493 = vmatprep.subr.mxu0 0.0
    %494 = vmatpush1.msra.mxu0 0.0
    %495 = vmatprep.subr.mxu0 0.0
    %496 = vmatpush1.msra.mxu0 0.0
    %497 = vmatprep.subr.mxu0 0.0
    %498 = vmatpush1.msra.mxu0 0.0
    %499 = vmatprep.subr.mxu0 0.0
    %500 = vmatpush1.msra.mxu0 0.0
    %501 = vmatprep.subr.mxu0 0.0
    %502 = vmatpush1.msra.mxu0 0.0
    %503 = vmatprep.subr.mxu0 0.0
    %504 = vmatpush1.msra.mxu0 0.0
    %505 = vmatprep.subr.mxu0 0.0
    %506 = vmatpush1.msra.mxu0 0.0
    %507 = vmatprep.subr.mxu0 0.0
    %508 = vmatpush1.msra.mxu0 0.0
    %509 = vmatprep.subr.mxu0 0.0
    %510 = vmatpush1.msra.mxu0 0.0
    %511 = vmatprep.subr.mxu0 0.0
    %512 = vmatpush1.msra.mxu0 0.0
    %513 = vmatprep.subr.mxu0 0.0
    %514 = vmatpush1.msra.mxu0 0.0
    %515 = vmatprep.subr.mxu0 0.0
    %516 = vmatpush1.msra.mxu0 0.0
    %517 = vmatprep.subr.mxu0 0.0
    %518 = vmatpush1.msra.mxu0 0.0
    %519 = vmatprep.subr.mxu0 0.0
    %520 = vmatpush1.msra.mxu0 0.0
    %521 = vmatprep.subr.mxu0 0.0
    %522 = vmatpush1.msra.mxu0 0.0
    %523 = vmatprep.mubr.f32.mxu0 0.0
    %524 = vmatmul.mubr.f32.gmra.mrb[0].mxu0 %v457
    %v525 = vpop.f32.mrb[0].mxu0
    %v526 = vadd.f32 %v455, %v525
    %v527 = vpop.f32.mrb[0].mxu0
    %528 = vdwg.mxu0
    %v529 = vlaneseq
    %v530 = vand.u32 %v529, 127
    %vm531 = vcmp.lt.s32.totalorder %v530, 8
    %v532 = vmul.f32 %v526, 2.0
    %v533 = vsel %vm531, %v526, %v532
    %v534 = vxor.u32 %v533, 2147483648
    %v535 = vmul.f32 %v534, 1.442695
    %v536 = vpow.pop %v535
    %v537 = vadd.f32 %v536, 1.0
    %v538 = vrcp.pop %v537
    %v539 = vmul.f32 1.0, %v538
    %v540 = vmul.f32 %v539, 2.0
    %v541 = vsub.f32 %v540, 1.0
    %v542 = vsel %vm531, %v539, %v541
    %543 = vst [vmem:[#allocation2] sm:$0xff] %v542
    // Predicated region
    $region22: #{net_actor_forward.1} parent=1 // pred_check
      _
    $region23: #{net_actor_forward.1} parent=1 // pred_check_branch
      %545 = sbr.rel (0) target = $region25
    $region24: #{net_actor_forward.1} parent=1 // pred_region
      %s547 = ssub.s32 128, 128
      %548 = vsyncadd [#allocation3], %s547
      %s550 = sshll.u32 [#allocation2], 4
      %s551 = int_to_ptr.vmem [resolvable:$true] %s550
      %553 = dma.vmem_to_hbm [thread:$0]  %s551, 128, %s5, [#allocation3]
    $region25: #{net_actor_forward.1} parent=1 // pred_fallthru
      _
    // Predicated region
    $region26: #{net_actor_forward.1} parent=1 // pred_check
      _
    $region27: #{net_actor_forward.1} parent=1 // pred_check_branch
      %555 = sbr.rel (0) target = $region29
    $region28: #{net_actor_forward.1} parent=1 // pred_region
      %556 = dma.done [#allocation3], 128
    $region29: #{net_actor_forward.1} parent=1 // pred_fallthru
      _
    %557 = vsyncpa [#allocation3], 1

</llo_original>
